<compile_context>
chip_gen: v7x
topology: tpu7x:2x2x1
jax: 0.10.0
libtpu: 0.0.40
codegen_flags: <defaults>
</compile_context>

<pallas_src>
import jax
import jax.numpy as jnp
from jax.experimental import pallas as pl
from jax.experimental.pallas import tpu as pltpu


def _round_up(x, m):
    return ((x + m - 1) // m) * m


def _vmem_cap_bytes():
    # Leave ~20% headroom below physical VMEM for compiler-internal scratch and
    # the auto-pipeline's own buffers (matters most on v7x's 64 MiB per-TC VMEM).
    try:
        phys = pltpu.get_tpu_info().vmem_capacity_bytes
    except Exception:
        phys = 128 * 1024 * 1024
    return int(phys * 0.8)


def _vmem_limit(needed_bytes):
    return int(min(max(2 * needed_bytes, 32 * 1024 * 1024), _vmem_cap_bytes()))


# ----------------------------------------------------------------------------
# Kernels
# ----------------------------------------------------------------------------
def hidden_kernel(f_ref, w1_ref, b1_ref, h_ref):
    # f_ref : (TM, Kp)  bf16   batch tile of flattened embeddings
    # w1_ref: (Kp, Hp)  bf16   resident first-layer weight
    # b1_ref: (1, Hp)   f32
    # h_ref : (TM, Hp)  bf16   hidden activations (tanh computed in f32)
    h = jnp.dot(f_ref[...], w1_ref[...], preferred_element_type=jnp.float32)
    h_ref[...] = jnp.tanh(h + b1_ref[...]).astype(h_ref.dtype)


def logits_kernel(h_ref, w2_ref, b2_ref, o_ref):
    # h_ref : (TM, Hp)  bf16   batch tile of hidden activations
    # w2_ref: (Hp, TN)  bf16   vocab column tile of second-layer weight
    # b2_ref: (1, TN)   f32
    # o_ref : (TM, TN)  f32    logits tile
    o = jnp.dot(h_ref[...], w2_ref[...], preferred_element_type=jnp.float32)
    o_ref[...] = (o + b2_ref[...]).astype(o_ref.dtype)


# ----------------------------------------------------------------------------
# Param preparation (once, at init) and forward
# ----------------------------------------------------------------------------
def prepare_params(C, W1, b1, W2, b2, *, tn=512):
    """One-time conversion of f32 (in, out)-layout params into kernel-ready
    form: bf16 MXU operands, K/H zero-padded to multiples of 128, V padded to
    the vocab tile TN. Doing this per forward call would cost a full HBM
    read+write of W2 every step."""
    K, H = W1.shape
    V = W2.shape[1]
    Kp = _round_up(K, 128)
    Hp = _round_up(H, 128)
    TN = min(_round_up(tn, 128), _round_up(V, 128))
    Vp = _round_up(V, TN)
    return dict(
        C=C.astype(jnp.bfloat16),
        W1=jnp.pad(W1, ((0, Kp - K), (0, Hp - H))).astype(jnp.bfloat16),
        b1=jnp.pad(b1, (0, Hp - H)).reshape(1, Hp).astype(jnp.float32),
        W2=jnp.pad(W2, ((0, Hp - H), (0, Vp - V))).astype(jnp.bfloat16),
        b2=jnp.pad(b2, (0, Vp - V)).reshape(1, Vp).astype(jnp.float32),
        K=K, V=V, TN=TN,
    )


def nplm_forward(tokens, params, *, tm=256, out_dtype=jnp.float32):
    """tokens: (batch, window) int32. params from prepare_params().
    Returns logits (batch, n_vocab) in out_dtype (f32 by default; pass
    jnp.bfloat16 to halve the logits HBM write if downstream allows)."""
    C, W1, b1, W2, b2 = (params[k] for k in ("C", "W1", "b1", "W2", "b2"))
    K, V, TN = params["K"], params["V"], params["TN"]
    Kp, Hp = W1.shape
    Vp = W2.shape[1]

    batch, window = tokens.shape
    emb_size = C.shape[1]
    assert window * emb_size == K

    # Glue: embedding gather + flatten + pad (small: batch x K, bf16).
    # NOTE: jnp.take clamps out-of-range indices on TPU (PyTorch would error).
    # TODO(synk): fuse the gather into hidden_kernel via PrefetchScalarGridSpec
    # (tokens in SMEM) + Element-indexed BlockSpec on C to skip this HBM pass.
    feats = jnp.take(C, tokens, axis=0).reshape(batch, K)

    TM = min(tm, _round_up(batch, 8))          # sublane-aligned batch tile
    Bp = _round_up(batch, TM)
    feats_p = jnp.pad(feats, ((0, Bp - batch), (0, Kp - K)))

    # --- Kernel 1: h = tanh(feats @ W1 + b1), streamed over batch tiles. ----
    vmem1 = (2 * TM * Kp * 2        # feats tiles (bf16, double-buffered)
             + 2 * Kp * Hp * 2      # W1 (grid-invariant; budgeted for 2 bufs)
             + 2 * Hp * 4           # b1
             + 2 * TM * Hp * 2)     # h output tiles (bf16)
    cost1 = pl.CostEstimate(
        flops=2 * Bp * Kp * Hp,
        transcendentals=Bp * Hp,
        bytes_accessed=Bp * Kp * 2 + Kp * Hp * 2 + Hp * 4 + Bp * Hp * 2)
    h = pl.pallas_call(
        hidden_kernel,
        out_shape=jax.ShapeDtypeStruct((Bp, Hp), jnp.bfloat16),
        grid=(Bp // TM,),
        in_specs=[
            pl.BlockSpec((TM, Kp), lambda i: (i, 0)),
            # TODO(synk): pipeline_mode=pl.Buffered(1) on W1/b1 (grid-invariant)
            # to halve their VMEM footprint when hidden/K get large.
            pl.BlockSpec((Kp, Hp), lambda i: (0, 0)),
            pl.BlockSpec((1, Hp), lambda i: (0, 0)),
        ],
        out_specs=pl.BlockSpec((TM, Hp), lambda i: (i, 0)),
        compiler_params=pltpu.CompilerParams(
            dimension_semantics=("parallel",),
            vmem_limit_bytes=_vmem_limit(vmem1)),
        cost_estimate=cost1,
    )(feats_p, W1, b1)

    # --- Kernel 2: logits = h @ W2 + b2. ------------------------------------
    # Grid is (vocab tiles, batch tiles): the vocab axis is the OUTER/slow axis,
    # so each W2 column tile's block index is constant across the inner batch
    # axis and it is DMA'd from HBM exactly once (W2 dominates HBM traffic).
    # Both axes are "parallel" (no carried state), so on v7x the vocab axis
    # splits across the two TensorCores even when batch fits in a single tile.
    n_j, n_i = Vp // TN, Bp // TM
    vmem2 = (2 * TM * Hp * 2        # h tiles (bf16)
             + 2 * Hp * TN * 2      # W2 column tiles (dominant)
             + 2 * TN * 4           # b2
             + 2 * TM * TN * 4)     # output tiles (f32)
    cost2 = pl.CostEstimate(
        flops=2 * Bp * Hp * Vp,
        transcendentals=0,
        bytes_accessed=(n_j * Bp * Hp * 2 + Hp * Vp * 2 + Vp * 4
                        + Bp * Vp * jnp.dtype(out_dtype).itemsize))
    out = pl.pallas_call(
        logits_kernel,
        out_shape=jax.ShapeDtypeStruct((Bp, Vp), out_dtype),
        grid=(n_j, n_i),
        in_specs=[
            pl.BlockSpec((TM, Hp), lambda j, i: (i, 0)),   # h: batch tile
            pl.BlockSpec((Hp, TN), lambda j, i: (0, j)),   # W2: vocab column tile
            pl.BlockSpec((1, TN), lambda j, i: (0, j)),    # b2: vocab tile
        ],
        out_specs=pl.BlockSpec((TM, TN), lambda j, i: (i, j)),
        compiler_params=pltpu.CompilerParams(
            dimension_semantics=("parallel", "parallel"),
            vmem_limit_bytes=_vmem_limit(vmem2)),
        cost_estimate=cost2,
    )(h, W2, b2)

    # Avoid an extra full read+write of the logits when no padding was needed.
    if Bp != batch or Vp != V:
        out = out[:batch, :V]
    return out


def init_params(key, n_vocab, window, emb_size, hidden_size):
    """Deterministic f32 init mirroring PyTorch defaults (Embedding ~ N(0,1),
    Linear ~ U(-1/sqrt(fan_in), 1/sqrt(fan_in))), in (in, out) layout."""
    k_c, k_w1, k_b1, k_w2, k_b2 = jax.random.split(key, 5)
    C = jax.random.normal(k_c, (n_vocab, emb_size), dtype=jnp.float32)

    fan_in1 = window * emb_size
    lim1 = 1.0 / (fan_in1 ** 0.5)
    W1 = jax.random.uniform(k_w1, (fan_in1, hidden_size), jnp.float32, -lim1, lim1)
    b1 = jax.random.uniform(k_b1, (hidden_size,), jnp.float32, -lim1, lim1)

    fan_in2 = hidden_size
    lim2 = 1.0 / (fan_in2 ** 0.5)
    W2 = jax.random.uniform(k_w2, (fan_in2, n_vocab), jnp.float32, -lim2, lim2)
    b2 = jax.random.uniform(k_b2, (n_vocab,), jnp.float32, -lim2, lim2)
    return C, W1, b1, W2, b2


if __name__ == "__main__":
    # Small shapes chosen so both grids span multiple tiles:
    #   tn=128 -> 3 vocab tiles (Vp = 384), tm=16 -> 2 batch tiles (Bp = 32),
    # exercising the W2-streamed-once (vocab-outer) path and the h pipeline.
    n_vocab, window, emb_size, hidden_size = 384, 4, 16, 64
    batch = 32

    key = jax.random.PRNGKey(0)
    k_params, k_tok = jax.random.split(key)
    C, W1, b1, W2, b2 = init_params(k_params, n_vocab, window, emb_size, hidden_size)
    tokens = jax.random.randint(k_tok, (batch, window), 0, n_vocab, dtype=jnp.int32)

    params = prepare_params(C, W1, b1, W2, b2, tn=128)   # once, at init
    logits = nplm_forward(tokens, params, tm=16)
    jax.block_until_ready(logits)
    assert logits.shape == (batch, n_vocab)
    assert logits.dtype == jnp.float32

    # Reference 1: same bf16 operand casts as the kernels (tight tolerance).
    feats = jnp.take(C, tokens, axis=0).reshape(batch, window * emb_size)
    h_f32 = jnp.tanh(
        jnp.dot(feats.astype(jnp.bfloat16), W1.astype(jnp.bfloat16),
                preferred_element_type=jnp.float32) + b1)
    ref_bf16 = jnp.dot(h_f32.astype(jnp.bfloat16), W2.astype(jnp.bfloat16),
                       preferred_element_type=jnp.float32) + b2
    assert jnp.allclose(logits, ref_bf16, atol=2e-2, rtol=2e-2)

    # Reference 2: pure f32 semantics of the PyTorch module (loose tolerance).
    ref_f32 = jnp.tanh(feats @ W1 + b1) @ W2 + b2
    assert jnp.allclose(logits, ref_f32, atol=8e-2, rtol=8e-2)

    print("KERNEL_OK")
</pallas_src>

<mosaic_0001>
module attributes {stable_mosaic.version = 11 : i64} {
  func.func @hidden_kernel(%arg0: i32, %arg1: memref<16x128xbf16, #tpu.memory_space<vmem>>, %arg2: memref<128x128xbf16, #tpu.memory_space<vmem>>, %arg3: memref<1x128xf32, #tpu.memory_space<vmem>>, %arg4: memref<16x128xbf16, #tpu.memory_space<vmem>>) attributes {dimension_semantics = [#tpu.dimension_semantics<parallel>], iteration_bounds = array<i64: 2>, scalar_prefetch = 0 : i64, scratch_operands = 0 : i64, tpu.core_type = #tpu.core_type<tc>, window_params = [{transform_indices = @transform_0, window_bounds = array<i64: 16, 128>}, {pipeline_mode = #tpu.pipeline_mode<synchronous>, transform_indices = @transform_1, window_bounds = array<i64: 128, 128>}, {pipeline_mode = #tpu.pipeline_mode<synchronous>, transform_indices = @transform_2, window_bounds = array<i64: 1, 128>}, {transform_indices = @transform_3, window_bounds = array<i64: 16, 128>}]} {
    %c0 = arith.constant 0 : index
    %c0_0 = arith.constant 0 : index
    %0 = vector.load %arg1[%c0, %c0_0] : memref<16x128xbf16, #tpu.memory_space<vmem>>, vector<16x128xbf16>
    %c0_1 = arith.constant 0 : index
    %c0_2 = arith.constant 0 : index
    %1 = vector.load %arg2[%c0_1, %c0_2] : memref<128x128xbf16, #tpu.memory_space<vmem>>, vector<128x128xbf16>
    %cst = arith.constant dense<0.000000e+00> : vector<16x128xf32>
    %2 = tpu.matmul %0, %1, %cst {dimension_numbers = #tpu.dot_dimension_numbers<[1], [0], [0], [1], [0, 0, 1, 1], [], []>} : vector<16x128xbf16>, vector<128x128xbf16>, vector<16x128xf32> -> vector<16x128xf32>
    %c0_3 = arith.constant 0 : index
    %c0_4 = arith.constant 0 : index
    %3 = vector.load %arg3[%c0_3, %c0_4] : memref<1x128xf32, #tpu.memory_space<vmem>>, vector<1x128xf32>
    %4 = vector.broadcast %3 : vector<1x128xf32> to vector<16x128xf32>
    %5 = arith.addf %2, %4 : vector<16x128xf32>
    %6 = math.tanh %5 : vector<16x128xf32>
    %7 = arith.truncf %6 : vector<16x128xf32> to vector<16x128xbf16>
    %c0_5 = arith.constant 0 : index
    %c0_6 = arith.constant 0 : index
    %8 = vector.load %arg4[%c0_5, %c0_6] : memref<16x128xbf16, #tpu.memory_space<vmem>>, vector<16x128xbf16>
    tpu.vector_store %arg4[%c0_5, %c0_6], %7 {strides = array<i32>} : memref<16x128xbf16, #tpu.memory_space<vmem>>, vector<16x128xbf16>,
    return
  }
  func.func @transform_0(%arg0: i32) -> (i32, i32) {
    %c0_i32 = arith.constant 0 : i32
    %c0_i32_0 = arith.constant 0 : i32
    return %arg0, %c0_i32 : i32, i32
  }
  func.func @transform_1(%arg0: i32) -> (i32, i32) {
    %c0_i32 = arith.constant 0 : i32
    %c0_i32_0 = arith.constant 0 : i32
    %c0_i32_1 = arith.constant 0 : i32
    return %c0_i32, %c0_i32_0 : i32, i32
  }
  func.func @transform_2(%arg0: i32) -> (i32, i32) {
    %c0_i32 = arith.constant 0 : i32
    %c0_i32_0 = arith.constant 0 : i32
    %c0_i32_1 = arith.constant 0 : i32
    return %c0_i32, %c0_i32_0 : i32, i32
  }
  func.func @transform_3(%arg0: i32) -> (i32, i32) {
    %c0_i32 = arith.constant 0 : i32
    %c0_i32_0 = arith.constant 0 : i32
    return %arg0, %c0_i32 : i32, i32
  }
}

</mosaic_0001>

<llo_original>
// kernel: tpu_custom_call.1
$region0: #{tpu_custom_call.1}
  #allocation0 [shape = 'u32[]', space=smem, size = 0x4, offset = 0x4, fixed_abs, tag = 'smem constant byte address 0x4 - core index']
  #allocation1 [shape = 'u32[144,128]{1,0:T(1,128)}', space=vmem, size = 0x12000, scoped, tag = 'internal scratch']
  %s0 = inlined_call_operand.hbm [shape: bf16[32,128], index: 0, kind: input, shape index: {}]
  %s1 = inlined_call_operand.hbm [shape: bf16[128,128], index: 1, kind: input, shape index: {}]
  %s2 = inlined_call_operand.vmem [shape: f32[1,128], index: 2, kind: input, shape index: {}]
  %s3 = inlined_call_operand.hbm [shape: bf16[32,128], index: 3, kind: output, shape index: {}]
  %s4 = sld [smem:[#allocation0]]
  $region53: #{tpu_custom_call.1} parent=0
    _
  %s6 = ssub.s32 1, %s4
  %s7 = scalar_select 0, %s6, %s4
  $region1: #{tpu_custom_call.1} parent=0
    #allocation2 [shape = 'u8[8192]{0}', space=vmem, size = 0x2000, scoped, tag = 'input window, operand 0']
    #allocation3 [shape = 's32[2]{0}', space=sflag, size = 0x8, scoped, tag = 'scoped memory for tpu_custom_call.1']
    #allocation4 [shape = 's32[2]{0}', space=sflag, size = 0x8, scoped, tag = 'scoped memory for tpu_custom_call.1']
    #allocation5 [shape = 'u8[32768]{0}', space=vmem, size = 0x8000, scoped, tag = 'input window, operand 1, single buffered']
    #allocation6 [shape = 's32[1]{0}', space=sflag, size = 0x4, scoped, tag = 'scoped memory for tpu_custom_call.1']
    #allocation7 [shape = 'u8[8192]{0}', space=vmem, size = 0x2000, scoped, tag = 'output window, operand 0']
    %8 = vsyncpa [#allocation3], 0
    %s9 = scalar_lea.sflag [#allocation3], 1
    %10 = vsyncpa %s9, 0
    %11 = vsyncpa [#allocation6], 0
    %12 = vsyncpa [#allocation4], 0
    %s13 = scalar_lea.sflag [#allocation4], 1
    %14 = vsyncpa %s13, 0
    loop: start=0, step=1, limit=4
    $region2: #{tpu_custom_call.1} parent=1 // loop_pre_header
      _
    $region3: #{tpu_custom_call.1} parent=1 // loop_header
      %s16 = sphi 0, %s20
      %p17 = scmp.ge.s32.totalorder %s16, 4
      %s26 = sphi 0, %s28
      %s29 = sphi 0, %s26
      %s30 = sphi 0, %s29
      %s46 = sphi 0, %s30
      %s50 = sphi 0, %s50
      %s52 = sphi 0, %s50
      %s53 = sphi 0, %s52
      %s67 = sphi 0, %s53
      %s71 = sphi 0, %s71
      %s73 = sphi 0, %s71
      %s74 = sphi 0, %s73
      %s88 = sphi 0, %s74
      %s94 = sphi 0, %s96
      %s97 = sphi 0, %s94
      %s98 = sphi 0, %s97
      %s114 = sphi 0, %s98
    $region4: #{tpu_custom_call.1} parent=1 // loop_header_branch
      %19 = sbr.rel (%p17) target = $region8
    $region5: #{tpu_custom_call.1} parent=1 // loop_body
      %s21 = ssub.s32 %s16, 1
      %s22 = ssub.s32 %s16, 2
      %s23 = sadd.s32 %s16, 1
      %s24 = ssub.s32 %s16, %s23
      %p25 = scmp.eq.s32.totalorder %s24, 0
      %s27 = sadd.s32 %s26, 1
      %s28 = scalar_select %p25, %s26, %s27
      %p31 = pneg %p25
      %p32 = scmp.eq.s32.totalorder %s16, 1
      %p33 = por %p31, %p32
      %p34 = scmp.ne.s32.totalorder %s26, %s29
      %p35 = scmp.eq.s32.totalorder %s16, 0
      %p36 = por %p34, %p35
      %p37 = scmp.ne.s32.totalorder %s26, %s29
      %p38 = scmp.eq.s32.totalorder %s21, 1
      %p39 = por %p37, %p38
      %p40 = scmp.ne.s32.totalorder %s29, %s30
      %p41 = scmp.eq.s32.totalorder %s21, 0
      %p42 = por %p40, %p41
      %p43 = scmp.ne.s32.totalorder %s29, %s30
      %p44 = scmp.eq.s32.totalorder %s22, 1
      %p45 = por %p43, %p44
      %p47 = scmp.ne.s32.totalorder %s30, %s46
      %p48 = scmp.eq.s32.totalorder %s22, 0
      %p49 = por %p47, %p48
      %s51 = sadd.s32 %s50, 1
      %p54 = scmp.eq.s32.totalorder %s16, 1
      %p55 = scmp.ne.s32.totalorder %s50, %s52
      %p56 = scmp.eq.s32.totalorder %s16, 0
      %p57 = por %p55, %p56
      %p58 = scmp.ne.s32.totalorder %s50, %s52
      %p59 = scmp.eq.s32.totalorder %s21, 1
      %p60 = por %p58, %p59
      %p61 = scmp.ne.s32.totalorder %s52, %s53
      %p62 = scmp.eq.s32.totalorder %s21, 0
      %p63 = por %p61, %p62
      %p64 = scmp.ne.s32.totalorder %s52, %s53
      %p65 = scmp.eq.s32.totalorder %s22, 1
      %p66 = por %p64, %p65
      %p68 = scmp.ne.s32.totalorder %s53, %s67
      %p69 = scmp.eq.s32.totalorder %s22, 0
      %p70 = por %p68, %p69
      %s72 = sadd.s32 %s71, 1
      %p75 = scmp.eq.s32.totalorder %s16, 1
      %p76 = scmp.ne.s32.totalorder %s71, %s73
      %p77 = scmp.eq.s32.totalorder %s16, 0
      %p78 = por %p76, %p77
      %p79 = scmp.ne.s32.totalorder %s71, %s73
      %p80 = scmp.eq.s32.totalorder %s21, 1
      %p81 = por %p79, %p80
      %p82 = scmp.ne.s32.totalorder %s73, %s74
      %p83 = scmp.eq.s32.totalorder %s21, 0
      %p84 = por %p82, %p83
      %p85 = scmp.ne.s32.totalorder %s73, %s74
      %p86 = scmp.eq.s32.totalorder %s22, 1
      %p87 = por %p85, %p86
      %p89 = scmp.ne.s32.totalorder %s74, %s88
      %p90 = scmp.eq.s32.totalorder %s22, 0
      %p91 = por %p89, %p90
      %s92 = ssub.s32 %s16, %s23
      %p93 = scmp.eq.s32.totalorder %s92, 0
      %s95 = sadd.s32 %s94, 1
      %s96 = scalar_select %p93, %s94, %s95
      %p99 = pneg %p93
      %p100 = scmp.eq.s32.totalorder %s16, 1
      %p101 = por %p99, %p100
      %p102 = scmp.ne.s32.totalorder %s94, %s97
      %p103 = scmp.eq.s32.totalorder %s16, 0
      %p104 = por %p102, %p103
      %p105 = scmp.ne.s32.totalorder %s94, %s97
      %p106 = scmp.eq.s32.totalorder %s21, 1
      %p107 = por %p105, %p106
      %p108 = scmp.ne.s32.totalorder %s97, %s98
      %p109 = scmp.eq.s32.totalorder %s21, 0
      %p110 = por %p108, %p109
      %p111 = scmp.ne.s32.totalorder %s97, %s98
      %p112 = scmp.eq.s32.totalorder %s22, 1
      %p113 = por %p111, %p112
      %p115 = scmp.ne.s32.totalorder %s98, %s114
      %p116 = scmp.eq.s32.totalorder %s22, 0
      %p117 = por %p115, %p116
      %p118 = scmp.le.s32.totalorder 1, %s16
      %p119 = scmp.lt.s32.totalorder %s16, 3
      %p120 = pnand %p118, %p119
      %p121 = pneg %p120
      // Predicated region
      $region9: #{tpu_custom_call.1} parent=5 // pred_check
        _
      $region10: #{tpu_custom_call.1} parent=5 // pred_check_branch
        %123 = sbr.rel (%p120) target = $region12
      $region11: #{tpu_custom_call.1} parent=5 // pred_region
        %s124 = ssub.s32 %s16, 1
        // Predicated region
        $region13: #{tpu_custom_call.1} parent=11 // pred_check
          %p125 = pneg %p63
        $region14: #{tpu_custom_call.1} parent=11 // pred_check_branch
          %127 = sbr.rel (%p125) target = $region16
        $region15: #{tpu_custom_call.1} parent=11 // pred_region
          %s129 = ssub.s32 1024, 1024
          %130 = vsyncadd [#allocation6], %s129
          %s131 = sshll.u32 [#allocation5], 4
          %s132 = int_to_ptr.vmem [resolvable:$true] %s131
          %137 = dma.hbm_to_vmem [thread:$0]  %s1, 1024, %s132, [#allocation6], 64, 64, 4
        $region16: #{tpu_custom_call.1} parent=11 // pred_fallthru
          _
        // Predicated region
        $region17: #{tpu_custom_call.1} parent=11 // pred_check
          %p138 = pneg %p84
        $region18: #{tpu_custom_call.1} parent=11 // pred_check_branch
          %140 = sbr.rel (%p138) target = $region20
        $region19: #{tpu_custom_call.1} parent=11 // pred_region
          _
        $region20: #{tpu_custom_call.1} parent=11 // pred_fallthru
          _
      $region12: #{tpu_custom_call.1} parent=5 // pred_fallthru
        _
      %p141 = scmp.lt.s32.totalorder %s16, 2
      // Predicated region
      $region21: #{tpu_custom_call.1} parent=5 // pred_check
        %p142 = pneg %p141
      $region22: #{tpu_custom_call.1} parent=5 // pred_check_branch
        %144 = sbr.rel (%p142) target = $region24
      $region23: #{tpu_custom_call.1} parent=5 // pred_region
        // Predicated region
        $region25: #{tpu_custom_call.1} parent=23 // pred_check
          %p145 = pneg %p36
        $region26: #{tpu_custom_call.1} parent=23 // pred_check_branch
          %147 = sbr.rel (%p145) target = $region28
        $region27: #{tpu_custom_call.1} parent=23 // pred_region
          %s148 = sand.u32 %s26, 1
          %s149 = scalar_lea.sflag [#allocation3], %s148
          %s150 = sand.u32 %s26, 1
          %s151 = smul.addr %s150, 8
          %s152 = scalar_lea.vmem [#allocation2], %s151
          %s153 = smul.u32 2, %s16
          %s155 = ssub.s32 128, 128
          %156 = vsyncadd %s149, %s155
          %s157 = smul.addr %s153, 64
          %s158 = scalar_lea.hbm %s0, %s157
          %s159 = sshll.u32 %s152, 4
          %s160 = int_to_ptr.vmem [resolvable:$true] %s159
          %165 = dma.hbm_to_vmem [thread:$0]  %s158, 128, %s160, %s149, 64, 64, 4
        $region28: #{tpu_custom_call.1} parent=23 // pred_fallthru
          _
      $region24: #{tpu_custom_call.1} parent=5 // pred_fallthru
        _
      %p166 = scmp.le.s32.totalorder 1, %s16
      %p167 = scmp.lt.s32.totalorder %s16, 3
      %p168 = pnand %p166, %p167
      %p169 = pneg %p168
      // Predicated region
      $region29: #{tpu_custom_call.1} parent=5 // pred_check
        _
      $region30: #{tpu_custom_call.1} parent=5 // pred_check_branch
        %171 = sbr.rel (%p168) target = $region32
      $region31: #{tpu_custom_call.1} parent=5 // pred_region
        %s172 = ssub.s32 %s16, 1
        %s173 = sand.u32 %s29, 1
        %s174 = scalar_lea.sflag [#allocation3], %s173
        %s175 = sand.u32 %s29, 1
        %s176 = smul.addr %s175, 8
        %s177 = scalar_lea.vmem [#allocation2], %s176
        // Predicated region
        $region33: #{tpu_custom_call.1} parent=31 // pred_check
          %p178 = pneg %p42
        $region34: #{tpu_custom_call.1} parent=31 // pred_check_branch
          %180 = sbr.rel (%p178) target = $region36
        $region35: #{tpu_custom_call.1} parent=31 // pred_region
          %181 = dma.done %s174, 128
        $region36: #{tpu_custom_call.1} parent=31 // pred_fallthru
          _
        // Predicated region
        $region37: #{tpu_custom_call.1} parent=31 // pred_check
          %p182 = pneg %p63
        $region38: #{tpu_custom_call.1} parent=31 // pred_check_branch
          %184 = sbr.rel (%p182) target = $region40
        $region39: #{tpu_custom_call.1} parent=31 // pred_region
          %185 = dma.done [#allocation6], 1024
        $region40: #{tpu_custom_call.1} parent=31 // pred_fallthru
          _
        %s186 = sand.u32 %s29, 1
        %s187 = scalar_lea.sflag [#allocation3], %s186
        %s188 = sand.u32 %s29, 1
        %s189 = smul.addr %s188, 8
        %s190 = scalar_lea.vmem [#allocation2], %s189
        %p191 = pneg %p42
        %p192 = pneg %p39
        %p193 = pneg %p63
        %p194 = pneg %p60
        %p195 = pneg %p84
        %p196 = pneg %p81
        %p197 = pneg %p110
        %p198 = pneg %p107
        %s199 = sand.u32 %s97, 1
        %s200 = scalar_lea.sflag [#allocation4], %s199
        %s201 = sand.u32 %s97, 1
        %s202 = smul.addr %s201, 8
        %s203 = scalar_lea.vmem [#allocation7], %s202
        %s204 = smul.u32 2, %s21
        %s205 = smul.u32 2, %s21
        %v207 = vld [vmem:[%s177] sm:$0xf]
        %v208 = vld [vmem:[%s177 + $0x4] sm:$0xf]
        %v209 = vld [vmem:[#allocation5] sm:$0xf]
        %v210 = vld [vmem:[#allocation5 + $0x4] sm:$0xf]
        %v211 = vld [vmem:[#allocation5 + $0x8] sm:$0xf]
        %v212 = vld [vmem:[#allocation5 + $0xc] sm:$0xf]
        %v213 = vld [vmem:[#allocation5 + $0x10] sm:$0xf]
        %v214 = vld [vmem:[#allocation5 + $0x14] sm:$0xf]
        %v215 = vld [vmem:[#allocation5 + $0x18] sm:$0xf]
        %v216 = vld [vmem:[#allocation5 + $0x1c] sm:$0xf]
        %v217 = vld [vmem:[#allocation5 + $0x20] sm:$0xf]
        %v218 = vld [vmem:[#allocation5 + $0x24] sm:$0xf]
        %v219 = vld [vmem:[#allocation5 + $0x28] sm:$0xf]
        %v220 = vld [vmem:[#allocation5 + $0x2c] sm:$0xf]
        %v221 = vld [vmem:[#allocation5 + $0x30] sm:$0xf]
        %v222 = vld [vmem:[#allocation5 + $0x34] sm:$0xf]
        %v223 = vld [vmem:[#allocation5 + $0x38] sm:$0xf]
        %v224 = vld [vmem:[#allocation5 + $0x3c] sm:$0xf]
        %v225 = vld [vmem:[%s2] sm:$0x1]
        %v227 = vlaneseq
        %v228 = vshrl.u32 %v227, 7
        %v229 = vsub.s32 0, %v228
        %v230 = vrot.slane %v225, %v229
        %v234 = vunpack.c.l.b16 %v207
        %v235 = vunpack.c.l.b16 %v208
        %v236 = vpack.c.b16 %v235, %v234
        %v254 = vunpack.c.l.b16 %v209
        %v255 = vunpack.c.l.b16 %v210
        %v256 = vunpack.c.l.b16 %v211
        %v257 = vunpack.c.l.b16 %v212
        %v258 = vunpack.c.l.b16 %v213
        %v259 = vunpack.c.l.b16 %v214
        %v260 = vunpack.c.l.b16 %v215
        %v261 = vunpack.c.l.b16 %v216
        %v262 = vunpack.c.l.b16 %v217
        %v263 = vunpack.c.l.b16 %v218
        %v264 = vunpack.c.l.b16 %v219
        %v265 = vunpack.c.l.b16 %v220
        %v266 = vunpack.c.l.b16 %v221
        %v267 = vunpack.c.l.b16 %v222
        %v268 = vunpack.c.l.b16 %v223
        %v269 = vunpack.c.l.b16 %v224
        %v270 = vpack.c.b16 %v255, %v254
        %v271 = vpack.c.b16 %v257, %v256
        %v272 = vpack.c.b16 %v259, %v258
        %v273 = vpack.c.b16 %v261, %v260
        %v274 = vpack.c.b16 %v263, %v262
        %v275 = vpack.c.b16 %v265, %v264
        %v276 = vpack.c.b16 %v267, %v266
        %v277 = vpack.c.b16 %v269, %v268
        %286 = vmatprep.subr.bf16.mxu0 0
        %287 = vmatpush1.bf16.msra.mxu0 %v270
        %288 = vmatprep.subr.bf16.mxu0 0
        %289 = vmatpush1.bf16.msra.mxu0 %v271
        %290 = vmatprep.subr.bf16.mxu0 0
        %291 = vmatpush1.bf16.msra.mxu0 %v272
        %292 = vmatprep.subr.bf16.mxu0 0
        %293 = vmatpush1.bf16.msra.mxu0 %v273
        %294 = vmatprep.subr.bf16.mxu0 0
        %295 = vmatpush1.bf16.msra.mxu0 %v274
        %296 = vmatprep.subr.bf16.mxu0 0
        %297 = vmatpush1.bf16.msra.mxu0 %v275
        %298 = vmatprep.subr.bf16.mxu0 0
        %299 = vmatpush1.bf16.msra.mxu0 %v276
        %300 = vmatprep.subr.bf16.mxu0 0
        %301 = vmatpush1.bf16.msra.mxu0 %v277
        %302 = vmatprep.subr.bf16.mxu0 0
        %303 = vmatpush1.bf16.msra.mxu0 0
        %304 = vmatprep.subr.bf16.mxu0 0
        %305 = vmatpush1.bf16.msra.mxu0 0
        %306 = vmatprep.subr.bf16.mxu0 0
        %307 = vmatpush1.bf16.msra.mxu0 0
        %308 = vmatprep.subr.bf16.mxu0 0
        %309 = vmatpush1.bf16.msra.mxu0 0
        %310 = vmatprep.subr.bf16.mxu0 0
        %311 = vmatpush1.bf16.msra.mxu0 0
        %312 = vmatprep.subr.bf16.mxu0 0
        %313 = vmatpush1.bf16.msra.mxu0 0
        %314 = vmatprep.subr.bf16.mxu0 0
        %315 = vmatpush1.bf16.msra.mxu0 0
        %316 = vmatprep.subr.bf16.mxu0 0
        %317 = vmatpush1.bf16.msra.mxu0 0
        %318 = vmatprep.mubr.bf16.mxu0 0
        %319 = vmatmul.mubr.bf16.gmra.mrb[0].mxu0 %v236
        %v320 = vpop.f32.mrb[0].mxu0
        %v321 = vadd.f32 %v230, %v320
        %v322 = vpop.f32.mrb[0].mxu0
        %v323 = vpop.f32.mrb[0].mxu0
        %v324 = vadd.f32 %v230, %v323
        %v325 = vpop.f32.mrb[0].mxu0
        %326 = vdwg.mxu0
        %v327 = vtanh.pop %v321
        %v328 = vtanh.pop %v324
        %v329 = vpack.c.bf16 %v328, %v327
        %v331 = vunpack.c.l.b16 %v329
        %v332 = vunpack.c.h.b16 %v329
        %v333 = vpack.c.b16 %v331, %v331
        %v334 = vpack.c.b16 %v332, %v332
        %337 = vst [vmem:[%s203] sm:$0xf] %v333
        %338 = vst [vmem:[%s203 + $0x4] sm:$0xf] %v334
        %s339 = sand.u32 %s97, 1
        %s340 = scalar_lea.sflag [#allocation4], %s339
        %s341 = sand.u32 %s97, 1
        %s342 = smul.addr %s341, 8
        %s343 = scalar_lea.vmem [#allocation7], %s342
        // Predicated region
        $region41: #{tpu_custom_call.1} parent=31 // pred_check
          %p344 = pneg %p107
        $region42: #{tpu_custom_call.1} parent=31 // pred_check_branch
          %346 = sbr.rel (%p344) target = $region44
        $region43: #{tpu_custom_call.1} parent=31 // pred_region
          %s347 = smul.u32 2, %s21
          %s349 = ssub.s32 128, 128
          %350 = vsyncadd %s340, %s349
          %s351 = smul.addr %s347, 64
          %s352 = scalar_lea.hbm %s3, %s351
          %s353 = sshll.u32 %s343, 4
          %s354 = int_to_ptr.vmem [resolvable:$true] %s353
          %359 = dma.vmem_to_hbm [thread:$0]  %s354, 128, %s352, %s340, 64, 64, 4
        $region44: #{tpu_custom_call.1} parent=31 // pred_fallthru
          _
      $region32: #{tpu_custom_call.1} parent=5 // pred_fallthru
        _
      %p360 = scmp.le.s32.totalorder 2, %s16
      // Predicated region
      $region45: #{tpu_custom_call.1} parent=5 // pred_check
        %p361 = pneg %p360
      $region46: #{tpu_custom_call.1} parent=5 // pred_check_branch
        %363 = sbr.rel (%p361) target = $region48
      $region47: #{tpu_custom_call.1} parent=5 // pred_region
        %s364 = ssub.s32 %s16, 2
        // Predicated region
        $region49: #{tpu_custom_call.1} parent=47 // pred_check
          %p365 = pneg %p113
        $region50: #{tpu_custom_call.1} parent=47 // pred_check_branch
          %367 = sbr.rel (%p365) target = $region52
        $region51: #{tpu_custom_call.1} parent=47 // pred_region
          %s368 = sand.u32 %s98, 1
          %s369 = scalar_lea.sflag [#allocation4], %s368
          %s370 = sand.u32 %s98, 1
          %s371 = smul.addr %s370, 8
          %s372 = scalar_lea.vmem [#allocation7], %s371
          %373 = dma.done %s369, 128
        $region52: #{tpu_custom_call.1} parent=47 // pred_fallthru
          _
      $region48: #{tpu_custom_call.1} parent=5 // pred_fallthru
        _
    $region6: #{tpu_custom_call.1} parent=1 // loop_footer
      %s20 = sadd.s32 1, %s16
    $region7: #{tpu_custom_call.1} parent=1 // loop_footer_branch
      %15 = sbr.rel target = $region3
    $region8: #{tpu_custom_call.1} parent=1 // loop_exit
      _
    %374 = vsyncpa [#allocation3], 1
    %s375 = scalar_lea.sflag [#allocation3], 1
    %376 = vsyncpa %s375, 1
    %377 = vsyncpa [#allocation6], 1
    %378 = vsyncpa [#allocation4], 1
    %s379 = scalar_lea.sflag [#allocation4], 1
    %380 = vsyncpa %s379, 1

</llo_original>
